<compile_context>
chip_gen: v7x
topology: tpu7x:2x2x1
jax: 0.10.0
libtpu: 0.0.40
codegen_flags: <defaults>
</compile_context>

<pallas_src>
import functools
import math

import jax
import jax.numpy as jnp
from jax.experimental import pallas as pl
from jax.experimental.pallas import tpu as pltpu


def _build_pe(embedding_dim: int, max_length: int = 2500) -> jnp.ndarray:
    """Sinusoidal table identical to the PyTorch __init__: (max_length, D)."""
    position = jnp.arange(0, max_length, dtype=jnp.float32)[:, None]          # (L, 1)
    div_term = jnp.exp(
        jnp.arange(0, embedding_dim, 2, dtype=jnp.float32)
        * (-math.log(10000.0) / embedding_dim)
    )                                                                          # (D/2,)
    pe = jnp.zeros((max_length, embedding_dim), dtype=jnp.float32)
    pe = pe.at[:, 0::2].set(jnp.sin(position * div_term))
    pe = pe.at[:, 1::2].set(jnp.cos(position * div_term))
    return pe


def _pe_add_wide_kernel(x_ref, pe_ref, o_ref):
    """x/pe/o all (ts, B*D): single full-width add -> unmasked whole-vreg stores."""
    o_ref[...] = x_ref[...] + pe_ref[...]


def _pe_add_sliced_kernel(x_ref, pe_ref, o_ref, *, batch: int, dim: int):
    """x/o: (ts, B*D); pe: (ts, D).  Only used when dim % 128 == 0 and batch is
    small, so every slice is lane-aligned (no masked stores / lane shifts) and
    pe is streamed from HBM only once per tile."""
    pe = pe_ref[...]
    for b in range(batch):                  # small, static, lane-aligned slices
        sl = slice(b * dim, (b + 1) * dim)
        o_ref[:, sl] = x_ref[:, sl] + pe


def _vmem_budgets():
    """(block_budget_bytes, vmem_limit_bytes) derived from the chip's VMEM."""
    default_cap = 64 * 1024 * 1024          # conservative (v7x-sized) fallback
    try:
        info = pltpu.get_tpu_info()
        cap = int(getattr(info, "vmem_capacity_bytes", default_cap))
        if cap <= 0:
            cap = default_cap
    except Exception:
        cap = default_cap
    # ~35% of physical VMEM for the double-buffered blocks, capped at 40 MiB
    # (v5e/v6e: 40 MiB; v7x: ~22 MiB), with an explicit scoped-VMEM limit that
    # leaves headroom below physical capacity on every generation.
    block_budget = min(int(cap * 0.35), 40 * 1024 * 1024)
    vmem_limit = min(int(cap * 0.75), 100 * 1024 * 1024)
    return block_budget, vmem_limit


def _pe_add_pallas(x: jnp.ndarray, pe_s: jnp.ndarray) -> jnp.ndarray:
    """x: (S, B, D); pe_s: (S, D) already in x.dtype. Returns x + pe_s[:, None, :]."""
    S, B, D = x.shape
    x2 = x.reshape(S, B * D)                # free: collapses trailing contiguous dims

    itemsize = jnp.dtype(x.dtype).itemsize
    sub = max(8, 32 // itemsize)            # sublane packing: 8 f32, 16 bf16, 32 int8

    # Lane-aligned sliced path only when every slice starts on a 128-lane
    # boundary AND the static unroll stays small; otherwise go full-width.
    use_sliced = (D % 128 == 0) and (B <= 8)
    if use_sliced:
        pe_in = pe_s                        # (S, D): read once per sequence tile
        pe_lane = D
        kernel = functools.partial(_pe_add_sliced_kernel, batch=B, dim=D)
    else:
        pe_in = jnp.tile(pe_s, (1, B))      # (S, B*D): lane-dense, unmasked stores
        pe_lane = B * D
        kernel = _pe_add_wide_kernel

    block_budget, vmem_limit = _vmem_budgets()

    # Double-buffered bytes per sequence row: x block + out block + pe block.
    row_bytes = (2 * B * D + pe_lane) * itemsize
    ts = max(sub, block_budget // (2 * row_bytes))
    if ts >= S:
        if S >= 2 * sub:
            # Whole problem fits one tile: still split into >=2 grid steps so
            # the "parallel" axis can be sharded across both TCs on v7x.
            half = pl.cdiv(S, 2)
            ts = ((half + sub - 1) // sub) * sub
        else:
            ts = S                          # full extent: always a legal block dim
    else:
        ts = max(sub, (ts // sub) * sub)    # dtype-aware sublane rounding

    grid = (pl.cdiv(S, ts),)                # ragged tail handled by Pallas padding

    out2 = pl.pallas_call(
        kernel,
        out_shape=jax.ShapeDtypeStruct((S, B * D), x.dtype),
        grid=grid,
        in_specs=[
            pl.BlockSpec((ts, B * D), lambda i: (i, 0)),
            pl.BlockSpec((ts, pe_lane), lambda i: (i, 0)),
        ],
        out_specs=pl.BlockSpec((ts, B * D), lambda i: (i, 0)),
        compiler_params=pltpu.CompilerParams(
            dimension_semantics=("parallel",),
            vmem_limit_bytes=vmem_limit,
        ),
    )(x2, pe_in)
    return out2.reshape(S, B, D)


def fixed_positional_encoding(
    x: jnp.ndarray, pe: jnp.ndarray, *, force_pallas: bool = False
) -> jnp.ndarray:
    """Forward pass of FixedPositionalEncoding: x + pe[:S] broadcast over batch.

    x: (S, B, D); pe: (max_length, D).
    """
    S, B, D = x.shape
    pe_s = pe[:S].astype(x.dtype)           # slice + cast once in HBM, not per block
    itemsize = jnp.dtype(x.dtype).itemsize
    if not force_pallas and x.size * itemsize < (2 << 20):
        # Small/medium inputs (< ~2 MiB): a standalone pallas_call pays launch
        # and pipeline warm-up that an XLA-fused elementwise add avoids.
        return x + pe_s[:, None, :]
    return _pe_add_pallas(x, pe_s)


if __name__ == "__main__":
    S, B, D = 8, 2, 32                      # seq_len, batch, embedding_dim
    max_length = 2500

    key = jax.random.PRNGKey(0)
    x = jax.random.normal(key, (S, B, D), dtype=jnp.float32)
    pe = _build_pe(D, max_length)

    # force_pallas=True so the demo exercises the kernel despite the tiny shape.
    out = fixed_positional_encoding(x, pe, force_pallas=True)
    out = jax.block_until_ready(out)

    ref = x + pe[:S][:, None, :]
    assert out.shape == (S, B, D)
    assert jnp.allclose(out, ref, atol=1e-6), "mismatch vs reference"

    print("KERNEL_OK")
</pallas_src>

<mosaic_0001>
module attributes {stable_mosaic.version = 11 : i64} {
  func.func @_pe_add_wide_kernel(%arg0: i32, %arg1: memref<8x64xf32, #tpu.memory_space<vmem>>, %arg2: memref<8x64xf32, #tpu.memory_space<vmem>>, %arg3: memref<8x64xf32, #tpu.memory_space<vmem>>) attributes {dimension_semantics = [#tpu.dimension_semantics<parallel>], iteration_bounds = array<i64: 1>, scalar_prefetch = 0 : i64, scratch_operands = 0 : i64, tpu.core_type = #tpu.core_type<tc>, window_params = [{transform_indices = @transform_0, window_bounds = array<i64: 8, 64>}, {transform_indices = @transform_1, window_bounds = array<i64: 8, 64>}, {transform_indices = @transform_2, window_bounds = array<i64: 8, 64>}]} {
    %c0 = arith.constant 0 : index
    %c0_0 = arith.constant 0 : index
    %0 = vector.load %arg1[%c0, %c0_0] : memref<8x64xf32, #tpu.memory_space<vmem>>, vector<8x64xf32>
    %c0_1 = arith.constant 0 : index
    %c0_2 = arith.constant 0 : index
    %1 = vector.load %arg2[%c0_1, %c0_2] : memref<8x64xf32, #tpu.memory_space<vmem>>, vector<8x64xf32>
    %2 = arith.addf %0, %1 : vector<8x64xf32>
    %c0_3 = arith.constant 0 : index
    %c0_4 = arith.constant 0 : index
    %3 = vector.load %arg3[%c0_3, %c0_4] : memref<8x64xf32, #tpu.memory_space<vmem>>, vector<8x64xf32>
    tpu.vector_store %arg3[%c0_3, %c0_4], %2 {strides = array<i32>} : memref<8x64xf32, #tpu.memory_space<vmem>>, vector<8x64xf32>,
    return
  }
  func.func @transform_0(%arg0: i32) -> (i32, i32) {
    %c0_i32 = arith.constant 0 : i32
    %c0_i32_0 = arith.constant 0 : i32
    return %arg0, %c0_i32 : i32, i32
  }
  func.func @transform_1(%arg0: i32) -> (i32, i32) {
    %c0_i32 = arith.constant 0 : i32
    %c0_i32_0 = arith.constant 0 : i32
    return %arg0, %c0_i32 : i32, i32
  }
  func.func @transform_2(%arg0: i32) -> (i32, i32) {
    %c0_i32 = arith.constant 0 : i32
    %c0_i32_0 = arith.constant 0 : i32
    return %arg0, %c0_i32 : i32, i32
  }
}

</mosaic_0001>

<llo_original>
// kernel: tpu_custom_call.1
$region0: #{tpu_custom_call.1}
  #allocation0 [shape = 'u32[]', space=smem, size = 0x4, offset = 0x4, fixed_abs, tag = 'smem constant byte address 0x4 - core index']
  #allocation1 [shape = 'u32[144,128]{1,0:T(1,128)}', space=vmem, size = 0x12000, scoped, tag = 'internal scratch']
  %s0 = inlined_call_operand.hbm [shape: f32[8,64], index: 0, kind: input, shape index: {}]
  %s1 = inlined_call_operand.hbm [shape: f32[8,64], index: 1, kind: input, shape index: {}]
  %s2 = inlined_call_operand.hbm [shape: f32[8,64], index: 2, kind: output, shape index: {}]
  %s3 = sld [smem:[#allocation0]]
  $region26: #{tpu_custom_call.1} parent=0
    _
  %s5 = ssub.s32 1, %s3
  %s6 = scalar_select 0, %s5, %s3
  $region1: #{tpu_custom_call.1} parent=0
    #allocation2 [shape = 'u8[4096]{0}', space=vmem, size = 0x1000, scoped, tag = 'input window, operand 0, single buffered']
    #allocation3 [shape = 's32[1]{0}', space=sflag, size = 0x4, scoped, tag = 'scoped memory for tpu_custom_call.1']
    #allocation4 [shape = 's32[1]{0}', space=sflag, size = 0x4, scoped, tag = 'scoped memory for tpu_custom_call.1']
    #allocation5 [shape = 'u8[4096]{0}', space=vmem, size = 0x1000, scoped, tag = 'input window, operand 1, single buffered']
    #allocation6 [shape = 's32[1]{0}', space=sflag, size = 0x4, scoped, tag = 'scoped memory for tpu_custom_call.1']
    #allocation7 [shape = 'u8[4096]{0}', space=vmem, size = 0x1000, scoped, tag = 'output window, operand 0, single buffered']
    %7 = vsyncpa [#allocation3], 0
    %8 = vsyncpa [#allocation6], 0
    %9 = vsyncpa [#allocation4], 0
    // Predicated region
    $region2: #{tpu_custom_call.1} parent=1 // pred_check
      _
    $region3: #{tpu_custom_call.1} parent=1 // pred_check_branch
      %11 = sbr.rel (0) target = $region5
    $region4: #{tpu_custom_call.1} parent=1 // pred_region
      %s13 = ssub.s32 128, 128
      %14 = vsyncadd [#allocation3], %s13
      %s16 = sshll.u32 [#allocation2], 4
      %s17 = int_to_ptr.vmem [resolvable:$true] %s16
      %19 = dma.hbm_to_vmem [thread:$0]  %s0, 128, %s17, [#allocation3]
    $region5: #{tpu_custom_call.1} parent=1 // pred_fallthru
      _
    // Predicated region
    $region6: #{tpu_custom_call.1} parent=1 // pred_check
      _
    $region7: #{tpu_custom_call.1} parent=1 // pred_check_branch
      %21 = sbr.rel (0) target = $region9
    $region8: #{tpu_custom_call.1} parent=1 // pred_region
      %s23 = ssub.s32 128, 128
      %24 = vsyncadd [#allocation6], %s23
      %s26 = sshll.u32 [#allocation5], 4
      %s27 = int_to_ptr.vmem [resolvable:$true] %s26
      %29 = dma.hbm_to_vmem [thread:$0]  %s1, 128, %s27, [#allocation6]
    $region9: #{tpu_custom_call.1} parent=1 // pred_fallthru
      _
    // Predicated region
    $region10: #{tpu_custom_call.1} parent=1 // pred_check
      _
    $region11: #{tpu_custom_call.1} parent=1 // pred_check_branch
      %31 = sbr.rel (0) target = $region13
    $region12: #{tpu_custom_call.1} parent=1 // pred_region
      %32 = dma.done [#allocation3], 128
    $region13: #{tpu_custom_call.1} parent=1 // pred_fallthru
      _
    // Predicated region
    $region14: #{tpu_custom_call.1} parent=1 // pred_check
      _
    $region15: #{tpu_custom_call.1} parent=1 // pred_check_branch
      %34 = sbr.rel (0) target = $region17
    $region16: #{tpu_custom_call.1} parent=1 // pred_region
      %35 = dma.done [#allocation6], 128
    $region17: #{tpu_custom_call.1} parent=1 // pred_fallthru
      _
    %v36 = vld [vmem:[#allocation2] sm:$0xff]
    %v37 = vld [vmem:[#allocation5] sm:$0xff]
    %v38 = vadd.f32 %v36, %v37
    %vm39 = vcmask 523264
    %40 = vst.msk [vmem:[#allocation7] sm:$0xff] %vm39, %v38
    // Predicated region
    $region18: #{tpu_custom_call.1} parent=1 // pred_check
      _
    $region19: #{tpu_custom_call.1} parent=1 // pred_check_branch
      %42 = sbr.rel (0) target = $region21
    $region20: #{tpu_custom_call.1} parent=1 // pred_region
      %s44 = ssub.s32 128, 128
      %45 = vsyncadd [#allocation4], %s44
      %s47 = sshll.u32 [#allocation7], 4
      %s48 = int_to_ptr.vmem [resolvable:$true] %s47
      %50 = dma.vmem_to_hbm [thread:$0]  %s48, 128, %s2, [#allocation4]
    $region21: #{tpu_custom_call.1} parent=1 // pred_fallthru
      _
    // Predicated region
    $region22: #{tpu_custom_call.1} parent=1 // pred_check
      _
    $region23: #{tpu_custom_call.1} parent=1 // pred_check_branch
      %52 = sbr.rel (0) target = $region25
    $region24: #{tpu_custom_call.1} parent=1 // pred_region
      %53 = dma.done [#allocation4], 128
    $region25: #{tpu_custom_call.1} parent=1 // pred_fallthru
      _
    %54 = vsyncpa [#allocation3], 1
    %55 = vsyncpa [#allocation6], 1
    %56 = vsyncpa [#allocation4], 1

</llo_original>
